<compile_context>
chip_gen: v7x
topology: tpu7x:2x2x1
jax: 0.10.0
libtpu: 0.0.40
codegen_flags: <defaults>
</compile_context>

<pallas_src>
import functools
import math

import jax
import jax.numpy as jnp
from jax import lax
from jax.experimental import pallas as pl
from jax.experimental.pallas import tpu as pltpu

_LANES = 128           # TPU vreg lane width
_ACC_ROWS = 8          # f32 sublane height -> (8, 128) accumulator block
_MAX_TILE_ROWS = 4096  # (4096, 128) f32 = 2 MiB per input per pipeline buffer


def _kl_kernel(mp_ref, m_ref, lv_ref, out_ref, *,
               rows, tile_rows, tiles_per_core, needs_mask):
    c = pl.program_id(0)   # TensorCore split axis ("parallel")
    j = pl.program_id(1)   # reduction over row tiles ("arbitrary")

    @pl.when(j == 0)
    def _():
        out_ref[...] = jnp.zeros_like(out_ref)

    lv = lv_ref[...].astype(jnp.float32)
    diff = m_ref[...].astype(jnp.float32) - mp_ref[...].astype(jnp.float32)
    term = lv + 1.0 - jnp.exp(lv) - diff * diff

    if needs_mask:
        # Ragged last tile (rows % tile_rows != 0) or phantom tile of the
        # 2-core split: rows at/after `rows` hold garbage -> zero them out.
        t = c * tiles_per_core + j            # global (unclamped) tile index
        valid = rows - t * tile_rows          # may be <= 0 or > tile_rows
        row_idx = lax.broadcasted_iota(jnp.int32, term.shape, 0)
        term = jnp.where(row_idx < valid, term, 0.0)

    # Fold the (tile_rows, 128) block onto the resident (8, 128) output block
    # with pure VPU adds; the cross-sublane/lane reduce and the -0.5 scaling
    # happen once, in the wrapper, on <= (16, 128) data.
    # TODO(synk): if a bundle dump shows this chain round-tripping the full
    # term tile through VMEM at 4096-row tiles, restructure as an unrolled
    # lax.fori_loop over sub-chunks.
    out_ref[...] += jnp.sum(
        term.reshape(tile_rows // _ACC_ROWS, _ACC_ROWS, _LANES), axis=0)


def kl_loss_customize(mean_prior, mean, logv):
    """JAX/Pallas equivalent of _KL_LOSS_CUSTOMIZE.forward -> scalar f32."""
    assert mean_prior.shape == mean.shape == logv.shape
    total = math.prod(mean.shape) if mean.ndim > 0 else 1

    # Row granularity = sublane packing of the narrowest input dtype
    # (8 rows for f32, 16 for bf16, 32 for int8/fp8).
    sub = max(32 // jnp.dtype(x.dtype).itemsize
              for x in (mean_prior, mean, logv))
    sub = max(sub, _ACC_ROWS)

    rows = pl.cdiv(total, _LANES)
    rows = pl.cdiv(rows, sub) * sub          # pad only to sublane granularity
    padded_total = rows * _LANES

    tile_rows = min(_MAX_TILE_ROWS, rows)
    num_tiles = pl.cdiv(rows, tile_rows)

    # Split the reduction across v7x's two TensorCores for large inputs; on
    # single-TC chips (v5e/v6e) the extra axis simply iterates sequentially.
    split = 2 if num_tiles >= 8 else 1
    tiles_per_core = pl.cdiv(num_tiles, split)
    has_phantom = split * tiles_per_core != num_tiles
    needs_mask = (rows % tile_rows != 0) or has_phantom

    def lane_dense(x):
        # Zero padding is exact for this formula: 0 + 1 - exp(0) - 0 == 0.
        # Padding is independent of tile size (< sub*128 elements of fill);
        # ragged grid tiles are masked in-kernel instead of padded here.
        # TODO(synk): a plain-JAX tail path could avoid this copy entirely for
        # element counts that are not a multiple of sub*128.
        x = x.reshape(-1)
        if padded_total != total:
            x = jnp.pad(x, (0, padded_total - total))
        return x.reshape(rows, _LANES)

    def in_map(c, j):
        t = c * tiles_per_core + j
        if has_phantom:
            # Keep the DMA in bounds for the phantom tile of an odd tile
            # count; its contribution is masked to zero in-kernel.
            t = jnp.minimum(t, num_tiles - 1)
        return (t, 0)

    in_spec = pl.BlockSpec((tile_rows, _LANES), in_map)

    kernel = functools.partial(
        _kl_kernel, rows=rows, tile_rows=tile_rows,
        tiles_per_core=tiles_per_core, needs_mask=needs_mask)

    cost = pl.CostEstimate(
        flops=6 * total,
        transcendentals=total,               # one exp per element
        bytes_accessed=sum(jnp.dtype(x.dtype).itemsize
                           for x in (mean_prior, mean, logv)) * total
        + split * _ACC_ROWS * _LANES * 4)

    partials = pl.pallas_call(
        kernel,
        out_shape=jax.ShapeDtypeStruct((split * _ACC_ROWS, _LANES), jnp.float32),
        grid_spec=pltpu.PrefetchScalarGridSpec(
            num_scalar_prefetch=0,
            grid=(split, tiles_per_core),
            in_specs=[in_spec, in_spec, in_spec],
            out_specs=pl.BlockSpec((_ACC_ROWS, _LANES), lambda c, j: (c, 0)),
        ),
        compiler_params=pltpu.CompilerParams(
            dimension_semantics=("parallel", "arbitrary"),
            # 3 inputs x 2 buffers x 2 MiB + tiny output block: well under
            # 32 MiB on every generation (v7x scoped default 32 of 64 MiB).
            vmem_limit_bytes=32 * 1024 * 1024,
        ),
        cost_estimate=cost,
    )(lane_dense(mean_prior), lane_dense(mean), lane_dense(logv))

    # Final tiny reduce over <= (16, 128) partials + the -0.5 scaling.
    return -0.5 * jnp.sum(partials)


def _reference(mean_prior, mean, logv):
    return -0.5 * jnp.sum(logv + 1.0 - jnp.exp(logv) - (mean - mean_prior) ** 2)


if __name__ == "__main__":
    key = jax.random.PRNGKey(0)
    k1, k2, k3, k4, k5, k6 = jax.random.split(key, 6)

    # 1) Small VAE-latent-like shape: batch=2, channels=4, spatial=16x16.
    shape = (2, 4, 16, 16)
    mean_prior = jax.random.normal(k1, shape, dtype=jnp.float32)
    mean = jax.random.normal(k2, shape, dtype=jnp.float32)
    logv = 0.1 * jax.random.normal(k3, shape, dtype=jnp.float32)

    loss = jax.block_until_ready(kl_loss_customize(mean_prior, mean, logv))
    ref = _reference(mean_prior, mean, logv)
    assert jnp.allclose(loss, ref, rtol=1e-4, atol=1e-2), (loss, ref)

    # 2) Medium shape exercising the ragged-last-tile mask path
    #    (4608 rows of 128 -> one full 4096-row tile + one partial tile).
    shape2 = (8, 8, 96, 96)
    mp2 = jax.random.normal(k4, shape2, dtype=jnp.float32)
    m2 = jax.random.normal(k5, shape2, dtype=jnp.float32)
    lv2 = 0.1 * jax.random.normal(k6, shape2, dtype=jnp.float32)

    loss2 = jax.block_until_ready(kl_loss_customize(mp2, m2, lv2))
    ref2 = _reference(mp2, m2, lv2)
    assert jnp.allclose(loss2, ref2, rtol=1e-4, atol=1.0), (loss2, ref2)

    print("KERNEL_OK")
</pallas_src>

<mosaic_0001>
module attributes {stable_mosaic.version = 11 : i64} {
  func.func @_kl_kernel(%arg0: i32, %arg1: i32, %arg2: memref<16x128xf32, #tpu.memory_space<vmem>>, %arg3: memref<16x128xf32, #tpu.memory_space<vmem>>, %arg4: memref<16x128xf32, #tpu.memory_space<vmem>>, %arg5: memref<8x128xf32, #tpu.memory_space<vmem>>) attributes {dimension_semantics = [#tpu.dimension_semantics<parallel>, #tpu.dimension_semantics<arbitrary>], iteration_bounds = array<i64: 1, 1>, scalar_prefetch = 0 : i64, scratch_operands = 0 : i64, tpu.core_type = #tpu.core_type<tc>, window_params = [{transform_indices = @transform_0, window_bounds = array<i64: 16, 128>}, {transform_indices = @transform_1, window_bounds = array<i64: 16, 128>}, {transform_indices = @transform_2, window_bounds = array<i64: 16, 128>}, {transform_indices = @transform_3, window_bounds = array<i64: 8, 128>}]} {
    %c0_i32 = arith.constant 0 : i32
    %0 = arith.cmpi eq, %arg1, %c0_i32 : i32
    %1 = arith.extui %0 : i1 to i32
    %c0_i32_0 = arith.constant 0 : i32
    %2 = arith.cmpi ne, %1, %c0_i32_0 : i32
    scf.if %2 {
      %cst_11 = arith.constant 0.000000e+00 : f32
      %18 = vector.broadcast %cst_11 : f32 to vector<8x128xf32>
      %c0_12 = arith.constant 0 : index
      %c0_13 = arith.constant 0 : index
      %19 = vector.load %arg5[%c0_12, %c0_13] : memref<8x128xf32, #tpu.memory_space<vmem>>, vector<8x128xf32>
      tpu.vector_store %arg5[%c0_12, %c0_13], %18 {strides = array<i32>} : memref<8x128xf32, #tpu.memory_space<vmem>>, vector<8x128xf32>,
    } else {
    }
    %c0 = arith.constant 0 : index
    %c0_1 = arith.constant 0 : index
    %3 = vector.load %arg4[%c0, %c0_1] : memref<16x128xf32, #tpu.memory_space<vmem>>, vector<16x128xf32>
    %c0_2 = arith.constant 0 : index
    %c0_3 = arith.constant 0 : index
    %4 = vector.load %arg3[%c0_2, %c0_3] : memref<16x128xf32, #tpu.memory_space<vmem>>, vector<16x128xf32>
    %c0_4 = arith.constant 0 : index
    %c0_5 = arith.constant 0 : index
    %5 = vector.load %arg2[%c0_4, %c0_5] : memref<16x128xf32, #tpu.memory_space<vmem>>, vector<16x128xf32>
    %6 = arith.subf %4, %5 : vector<16x128xf32>
    %cst = arith.constant 1.000000e+00 : f32
    %7 = vector.broadcast %cst : f32 to vector<16x128xf32>
    %8 = arith.addf %3, %7 : vector<16x128xf32>
    %9 = math.exp %3 : vector<16x128xf32>
    %10 = arith.subf %8, %9 : vector<16x128xf32>
    %11 = arith.mulf %6, %6 : vector<16x128xf32>
    %12 = arith.subf %10, %11 : vector<16x128xf32>
    %c0_6 = arith.constant 0 : index
    %c0_7 = arith.constant 0 : index
    %13 = vector.load %arg5[%c0_6, %c0_7] : memref<8x128xf32, #tpu.memory_space<vmem>>, vector<8x128xf32>
    %14 = vector.shape_cast %12 : vector<16x128xf32> to vector<2x8x128xf32>
    %cst_8 = arith.constant dense<0.000000e+00> : vector<8x128xf32>
    %15 = vector.multi_reduction <add>, %14, %cst_8 [0] : vector<2x8x128xf32> to vector<8x128xf32>
    %16 = arith.addf %13, %15 : vector<8x128xf32>
    %c0_9 = arith.constant 0 : index
    %c0_10 = arith.constant 0 : index
    %17 = vector.load %arg5[%c0_9, %c0_10] : memref<8x128xf32, #tpu.memory_space<vmem>>, vector<8x128xf32>
    tpu.vector_store %arg5[%c0_9, %c0_10], %16 {strides = array<i32>} : memref<8x128xf32, #tpu.memory_space<vmem>>, vector<8x128xf32>,
    return
  }
  func.func @transform_0(%arg0: i32, %arg1: i32) -> (i32, i32) {
    %c1_i32 = arith.constant 1 : i32
    %0 = arith.muli %arg0, %c1_i32 : i32
    %1 = arith.addi %0, %arg1 : i32
    %c0_i32 = arith.constant 0 : i32
    %c0_i32_0 = arith.constant 0 : i32
    return %1, %c0_i32 : i32, i32
  }
  func.func @transform_1(%arg0: i32, %arg1: i32) -> (i32, i32) {
    %c1_i32 = arith.constant 1 : i32
    %0 = arith.muli %arg0, %c1_i32 : i32
    %1 = arith.addi %0, %arg1 : i32
    %c0_i32 = arith.constant 0 : i32
    %c0_i32_0 = arith.constant 0 : i32
    return %1, %c0_i32 : i32, i32
  }
  func.func @transform_2(%arg0: i32, %arg1: i32) -> (i32, i32) {
    %c1_i32 = arith.constant 1 : i32
    %0 = arith.muli %arg0, %c1_i32 : i32
    %1 = arith.addi %0, %arg1 : i32
    %c0_i32 = arith.constant 0 : i32
    %c0_i32_0 = arith.constant 0 : i32
    return %1, %c0_i32 : i32, i32
  }
  func.func @transform_3(%arg0: i32, %arg1: i32) -> (i32, i32) {
    %c0_i32 = arith.constant 0 : i32
    %c0_i32_0 = arith.constant 0 : i32
    return %arg0, %c0_i32 : i32, i32
  }
}

</mosaic_0001>

<llo_original>
// kernel: tpu_custom_call.1
$region0: #{tpu_custom_call.1}
  #allocation0 [shape = 'u32[]', space=smem, size = 0x4, offset = 0x4, fixed_abs, tag = 'smem constant byte address 0x4 - core index']
  #allocation1 [shape = 'u32[144,128]{1,0:T(1,128)}', space=vmem, size = 0x12000, scoped, tag = 'internal scratch']
  %s0 = inlined_call_operand.hbm [shape: f32[16,128], index: 0, kind: input, shape index: {}]
  %s1 = inlined_call_operand.hbm [shape: f32[16,128], index: 1, kind: input, shape index: {}]
  %s2 = inlined_call_operand.hbm [shape: f32[16,128], index: 2, kind: input, shape index: {}]
  %s3 = inlined_call_operand.hbm [shape: f32[8,128], index: 3, kind: output, shape index: {}]
  %s4 = sld [smem:[#allocation0]]
  $region38: #{tpu_custom_call.1} parent=0
    _
  %s6 = ssub.s32 1, %s4
  %s7 = scalar_select 0, %s6, %s4
  $region1: #{tpu_custom_call.1} parent=0
    #allocation2 [shape = 'u8[8192]{0}', space=vmem, size = 0x2000, scoped, tag = 'input window, operand 0, single buffered']
    #allocation3 [shape = 's32[1]{0}', space=sflag, size = 0x4, scoped, tag = 'scoped memory for tpu_custom_call.1']
    #allocation4 [shape = 's32[1]{0}', space=sflag, size = 0x4, scoped, tag = 'scoped memory for tpu_custom_call.1']
    #allocation5 [shape = 'u8[8192]{0}', space=vmem, size = 0x2000, scoped, tag = 'input window, operand 1, single buffered']
    #allocation6 [shape = 's32[1]{0}', space=sflag, size = 0x4, scoped, tag = 'scoped memory for tpu_custom_call.1']
    #allocation7 [shape = 'u8[8192]{0}', space=vmem, size = 0x2000, scoped, tag = 'input window, operand 2, single buffered']
    #allocation8 [shape = 'u8[4096]{0}', space=vmem, size = 0x1000, scoped, tag = 'output window, operand 0, single buffered']
    %8 = vsyncpa [#allocation3], 0
    %9 = vsyncpa [#allocation6], 0
    %10 = vsyncpa [#allocation4], 0
    // Predicated region
    $region2: #{tpu_custom_call.1} parent=1 // pred_check
      _
    $region3: #{tpu_custom_call.1} parent=1 // pred_check_branch
      %12 = sbr.rel (0) target = $region5
    $region4: #{tpu_custom_call.1} parent=1 // pred_region
      %s13 = sadd.s32 0, 0
      %s14 = smul.u32 2, %s13
      %s16 = ssub.s32 256, 256
      %17 = vsyncadd [#allocation3], %s16
      %s18 = smul.addr %s14, 128
      %s19 = scalar_lea.hbm %s0, %s18
      %s20 = sshll.u32 [#allocation2], 4
      %s21 = int_to_ptr.vmem [resolvable:$true] %s20
      %26 = dma.hbm_to_vmem [thread:$0]  %s19, 256, %s21, [#allocation3], 128, 128, 8
    $region5: #{tpu_custom_call.1} parent=1 // pred_fallthru
      _
    // Predicated region
    $region6: #{tpu_custom_call.1} parent=1 // pred_check
      _
    $region7: #{tpu_custom_call.1} parent=1 // pred_check_branch
      %28 = sbr.rel (0) target = $region9
    $region8: #{tpu_custom_call.1} parent=1 // pred_region
      %s29 = sadd.s32 0, 0
      %s30 = smul.u32 2, %s29
      %s32 = ssub.s32 256, 256
      %33 = vsyncadd [#allocation6], %s32
      %s34 = smul.addr %s30, 128
      %s35 = scalar_lea.hbm %s1, %s34
      %s36 = sshll.u32 [#allocation5], 4
      %s37 = int_to_ptr.vmem [resolvable:$true] %s36
      %42 = dma.hbm_to_vmem [thread:$0]  %s35, 256, %s37, [#allocation6], 128, 128, 8
    $region9: #{tpu_custom_call.1} parent=1 // pred_fallthru
      _
    // Predicated region
    $region10: #{tpu_custom_call.1} parent=1 // pred_check
      _
    $region11: #{tpu_custom_call.1} parent=1 // pred_check_branch
      %44 = sbr.rel (0) target = $region13
    $region12: #{tpu_custom_call.1} parent=1 // pred_region
      %s45 = sadd.s32 0, 0
      %s46 = smul.u32 2, %s45
      %s48 = ssub.s32 256, 256
      %49 = vsyncadd [#allocation6], %s48
      %s50 = smul.addr %s46, 128
      %s51 = scalar_lea.hbm %s2, %s50
      %s52 = sshll.u32 [#allocation7], 4
      %s53 = int_to_ptr.vmem [resolvable:$true] %s52
      %58 = dma.hbm_to_vmem [thread:$0]  %s51, 256, %s53, [#allocation6], 128, 128, 8
    $region13: #{tpu_custom_call.1} parent=1 // pred_fallthru
      _
    // Predicated region
    $region14: #{tpu_custom_call.1} parent=1 // pred_check
      _
    $region15: #{tpu_custom_call.1} parent=1 // pred_check_branch
      %60 = sbr.rel (0) target = $region17
    $region16: #{tpu_custom_call.1} parent=1 // pred_region
      %61 = dma.done [#allocation3], 256
    $region17: #{tpu_custom_call.1} parent=1 // pred_fallthru
      _
    // Predicated region
    $region18: #{tpu_custom_call.1} parent=1 // pred_check
      _
    $region19: #{tpu_custom_call.1} parent=1 // pred_check_branch
      %63 = sbr.rel (0) target = $region21
    $region20: #{tpu_custom_call.1} parent=1 // pred_region
      %64 = dma.done [#allocation6], 256
    $region21: #{tpu_custom_call.1} parent=1 // pred_fallthru
      _
    // Predicated region
    $region22: #{tpu_custom_call.1} parent=1 // pred_check
      _
    $region23: #{tpu_custom_call.1} parent=1 // pred_check_branch
      %66 = sbr.rel (0) target = $region25
    $region24: #{tpu_custom_call.1} parent=1 // pred_region
      %67 = dma.done [#allocation6], 256
    $region25: #{tpu_custom_call.1} parent=1 // pred_fallthru
      _
    %s68 = sadd.s32 0, 0
    %s69 = smul.u32 2, %s68
    %s70 = sadd.s32 0, 0
    %s71 = smul.u32 2, %s70
    %s72 = sadd.s32 0, 0
    %s73 = smul.u32 2, %s72
    %p74 = scmp.eq.s32.totalorder 0, 0
    // Predicated region
    $region26: #{tpu_custom_call.1} parent=1 // pred_check
      %p75 = pneg %p74
    $region27: #{tpu_custom_call.1} parent=1 // pred_check_branch
      %77 = sbr.rel (%p75) target = $region29
    $region28: #{tpu_custom_call.1} parent=1 // pred_region
      %78 = vst [vmem:[#allocation8] sm:$0xff] 0.0
    $region29: #{tpu_custom_call.1} parent=1 // pred_fallthru
      _
    %v79 = vld [vmem:[#allocation7] sm:$0xff]
    %v80 = vld [vmem:[#allocation7 + $0x8] sm:$0xff]
    %v81 = vld [vmem:[#allocation5] sm:$0xff]
    %v82 = vld [vmem:[#allocation5 + $0x8] sm:$0xff]
    %v83 = vld [vmem:[#allocation2] sm:$0xff]
    %v84 = vld [vmem:[#allocation2 + $0x8] sm:$0xff]
    %v85 = vsub.f32 %v81, %v83
    %v86 = vsub.f32 %v82, %v84
    %v87 = vadd.f32 %v79, 1.0
    %v88 = vadd.f32 %v80, 1.0
    %v89 = vmul.f32 %v79, 1.442695
    %v90 = vpow.pop %v89
    %v91 = vmul.f32 %v80, 1.442695
    %v92 = vpow.pop %v91
    %v93 = vsub.f32 %v87, %v90
    %v94 = vsub.f32 %v88, %v92
    %v95 = vmul.f32 %v85, %v85
    %v96 = vmul.f32 %v86, %v86
    %v97 = vsub.f32 %v93, %v95
    %v98 = vsub.f32 %v94, %v96
    %v99 = vld [vmem:[#allocation8] sm:$0xff]
    %v100 = vadd.f32 %v97, %v98
    %v101 = vadd.f32 %v99, %v100
    %102 = vst [vmem:[#allocation8] sm:$0xff] %v101
    // Predicated region
    $region30: #{tpu_custom_call.1} parent=1 // pred_check
      _
    $region31: #{tpu_custom_call.1} parent=1 // pred_check_branch
      %104 = sbr.rel (0) target = $region33
    $region32: #{tpu_custom_call.1} parent=1 // pred_region
      %s106 = ssub.s32 128, 128
      %107 = vsyncadd [#allocation4], %s106
      %s109 = sshll.u32 [#allocation8], 4
      %s110 = int_to_ptr.vmem [resolvable:$true] %s109
      %112 = dma.vmem_to_hbm [thread:$0]  %s110, 128, %s3, [#allocation4]
    $region33: #{tpu_custom_call.1} parent=1 // pred_fallthru
      _
    // Predicated region
    $region34: #{tpu_custom_call.1} parent=1 // pred_check
      _
    $region35: #{tpu_custom_call.1} parent=1 // pred_check_branch
      %114 = sbr.rel (0) target = $region37
    $region36: #{tpu_custom_call.1} parent=1 // pred_region
      %115 = dma.done [#allocation4], 128
    $region37: #{tpu_custom_call.1} parent=1 // pred_fallthru
      _
    %116 = vsyncpa [#allocation3], 1
    %117 = vsyncpa [#allocation6], 1
    %118 = vsyncpa [#allocation4], 1

</llo_original>
